<compile_context>
chip_gen: v5e
topology: v5e:2x2
jax: 0.10.0
libtpu: 0.0.40
codegen_flags: <defaults>
</compile_context>

<pallas_src>
import functools
import math

import jax
import jax.numpy as jnp
from jax.experimental import pallas as pl
from jax.experimental.pallas import tpu as pltpu


def _round_up(x, m):
    return ((x + m - 1) // m) * m


# ----------------------------------------------------------------------------
# Path A: VMEM-resident table (small vocab tables).
# ----------------------------------------------------------------------------
def _embed_resident_kernel(ids_ref, table_ref, out_ref, *, scale, tile, g):
    # ids_ref   : (n_pad,) int32 token ids in SMEM (scalar prefetch)
    # table_ref : (V, D) embedding table, VMEM resident (constant block index)
    # out_ref   : (tile // g, g * D) output tile; g tokens packed per row so the
    #             output block is a dense 128-lane slab when D < 128.
    d = table_ref.shape[1]
    base = pl.program_id(0) * tile
    rows = tile // g

    def body(r, carry):
        for c in range(g):                       # static, fully unrolled
            tok = ids_ref[base + r * g + c]
            row = table_ref[pl.ds(tok, 1), :].astype(jnp.float32) * scale
            out_ref[pl.ds(r, 1), pl.ds(c * d, d)] = row.astype(out_ref.dtype)
        return carry

    jax.lax.fori_loop(0, rows, body, None, unroll=min(8, rows))


# ----------------------------------------------------------------------------
# Path B: HBM table + per-row DMA gather (large vocab tables; v7x-safe).
# ----------------------------------------------------------------------------
def _embed_gather_kernel(ids_ref, emb_hbm, out_ref, buf, sem, *, scale, tile):
    # ids_ref : (n_pad,) int32 token ids in SMEM (scalar prefetch)
    # emb_hbm : (V, D) embedding table left in HBM (memory_space=pl.ANY)
    # out_ref : (tile, D) output tile in VMEM
    # buf     : (2, tile, D) VMEM gather buffer (cross-tile double buffer)
    # sem     : (2,) DMA semaphores, one per buffer slot
    i = pl.program_id(0)
    n_tiles = pl.num_programs(0)

    def issue_tile(tile_idx, slot):
        base = tile_idx * tile

        def body(j, carry):
            tok = ids_ref[base + j]
            pltpu.make_async_copy(
                emb_hbm.at[pl.ds(tok, 1)],
                buf.at[slot, pl.ds(j, 1)],
                sem.at[slot],
            ).start()
            return carry

        # Unrolled so SMEM id loads / address math / descriptor pushes co-issue.
        jax.lax.fori_loop(0, tile, body, None, unroll=min(8, tile))

    # Prologue: tile 0's gather is issued on the first grid step.
    @pl.when(i == 0)
    def _():
        issue_tile(0, 0)

    # Lookahead: issue tile i+1's row DMAs *before* waiting on tile i, so the
    # next gather overlaps this tile's wait / scale / output writeback.  This
    # cross-step dependence is why the grid axis is marked "arbitrary".
    @pl.when(i + 1 < n_tiles)
    def _():
        issue_tile(i + 1, (i + 1) % 2)

    slot = i % 2
    # ONE aggregated wait: the DMA semaphore counts bytes, and the `tile` row
    # copies into this slot total exactly one full (tile, D) buffer.
    pltpu.make_async_copy(buf.at[slot], buf.at[slot], sem.at[slot]).wait()

    # Fused sqrt(d_model) scale; upcast to f32 before scaling (bf16-safe).
    out_ref[...] = (buf[slot].astype(jnp.float32) * scale).astype(out_ref.dtype)


# ----------------------------------------------------------------------------
# Wrapper
# ----------------------------------------------------------------------------
def _embed_chunk(ids_flat, emb_table, *, tq, resident_table_max_bytes,
                 force_hbm_gather):
    n = ids_flat.shape[0]
    V, D = emb_table.shape
    itemsize = jnp.dtype(emb_table.dtype).itemsize
    scale = float(math.sqrt(D))

    table_bytes = V * D * itemsize
    use_resident = (not force_hbm_gather) and table_bytes <= resident_table_max_bytes

    # Token packing factor: with D < 128 pack g tokens per output row so the
    # output block (and its writeback DMA) is lane-dense.
    g = 128 // D if (use_resident and D < 128 and 128 % D == 0) else 1
    align = 8 * g

    # Token tile: as large as requested, but (a) a multiple of the (8,128)
    # alignment, (b) capped so double-buffered gather + double-buffered output
    # stays ~<= 8 MiB of VMEM (safe under v7x's 64 MiB / default scoped
    # limits), (c) no larger than the padded token count.
    vmem_budget = 8 * 1024 * 1024
    cap = max(align, (vmem_budget // (4 * D * itemsize)) // align * align)
    tile = max(align, min(_round_up(tq, align), cap, _round_up(n, align)))
    n_pad = _round_up(n, tile)

    ids_p = ids_flat
    if n_pad != n:
        ids_p = jnp.pad(ids_flat, (0, n_pad - n))   # pad id 0 — valid, sliced off

    grid = (n_pad // tile,)

    if use_resident:
        out = pl.pallas_call(
            functools.partial(_embed_resident_kernel, scale=scale, tile=tile, g=g),
            out_shape=jax.ShapeDtypeStruct((n_pad // g, g * D), emb_table.dtype),
            grid_spec=pltpu.PrefetchScalarGridSpec(
                num_scalar_prefetch=1,                      # ids -> SMEM
                grid=grid,
                in_specs=[pl.BlockSpec((V, D), lambda i, ids: (0, 0))],
                out_specs=pl.BlockSpec((tile // g, g * D), lambda i, ids: (i, 0)),
            ),
            compiler_params=pltpu.CompilerParams(
                dimension_semantics=("parallel",),
                vmem_limit_bytes=32 * 1024 * 1024,
            ),
        )(ids_p, emb_table)
    else:
        out = pl.pallas_call(
            functools.partial(_embed_gather_kernel, scale=scale, tile=tile),
            out_shape=jax.ShapeDtypeStruct((n_pad, D), emb_table.dtype),
            grid_spec=pltpu.PrefetchScalarGridSpec(
                num_scalar_prefetch=1,                      # ids -> SMEM
                grid=grid,
                in_specs=[pl.BlockSpec(memory_space=pl.ANY)],  # table in HBM
                out_specs=pl.BlockSpec((tile, D), lambda i, ids: (i, 0)),
                scratch_shapes=[
                    pltpu.VMEM((2, tile, D), emb_table.dtype),  # double buffer
                    pltpu.SemaphoreType.DMA((2,)),              # per-slot sems
                ],
            ),
            compiler_params=pltpu.CompilerParams(
                dimension_semantics=("arbitrary",),  # cross-step DMA lookahead
                vmem_limit_bytes=32 * 1024 * 1024,
            ),
        )(ids_p, emb_table)

    return out.reshape(n_pad, D)[:n]


def input_embedding(ids, emb_table, *, tq=256,
                    resident_table_max_bytes=4 * 1024 * 1024,
                    force_hbm_gather=False, max_tokens_per_call=8192):
    """InputEmbedding forward: emb_table[ids] * sqrt(d_model).

    ids: (B, S) integer token ids; emb_table: (V, D). Returns (B, S, D).
    """
    B, S = ids.shape
    V, D = emb_table.shape
    N = B * S
    # Clamp ids so a bad token can never become an OOB HBM DMA.
    ids_flat = jnp.clip(ids.reshape(N).astype(jnp.int32), 0, V - 1)

    # Chunk very long sequences so the scalar-prefetched id array stays small
    # in SMEM (1-D arrays pad to next_pow2(4N) bytes).
    pieces = []
    for start in range(0, N, max_tokens_per_call):
        chunk = ids_flat[start:start + max_tokens_per_call]
        pieces.append(_embed_chunk(
            chunk, emb_table, tq=tq,
            resident_table_max_bytes=resident_table_max_bytes,
            force_hbm_gather=force_hbm_gather))
    out = pieces[0] if len(pieces) == 1 else jnp.concatenate(pieces, axis=0)
    return out.reshape(B, S, D)


if __name__ == "__main__":
    vocab_size, d_model = 64, 32
    batch, seq = 2, 16

    key = jax.random.PRNGKey(0)
    k_emb, k_ids, k_emb2, k_ids2 = jax.random.split(key, 4)

    # Deterministic "nn.Embedding" weight init (standard normal, like PyTorch).
    emb_table = jax.random.normal(k_emb, (vocab_size, d_model), dtype=jnp.float32)
    ids = jax.random.randint(k_ids, (batch, seq), 0, vocab_size, dtype=jnp.int32)
    ref = emb_table[ids] * math.sqrt(d_model)

    # 1) Auto path: small table -> VMEM-resident gather, token-packed (D < 128,
    #    lane-dense output block).
    out_res = jax.block_until_ready(input_embedding(ids, emb_table))
    assert out_res.shape == (batch, seq, d_model)
    assert out_res.dtype == jnp.float32
    assert jnp.allclose(out_res, ref, atol=1e-5, rtol=1e-5)

    # 2) Forced HBM DMA-gather path with several grid steps (exercises the
    #    double-buffered lookahead + single aggregated wait).
    out_dma = jax.block_until_ready(
        input_embedding(ids, emb_table, tq=8, force_hbm_gather=True))
    assert jnp.allclose(out_dma, ref, atol=1e-5, rtol=1e-5)

    # 3) Resident path with d_model >= 128 (no token packing, g == 1).
    emb_table2 = jax.random.normal(k_emb2, (80, 128), dtype=jnp.float32)
    ids2 = jax.random.randint(k_ids2, (2, 8), 0, 80, dtype=jnp.int32)
    ref2 = emb_table2[ids2] * math.sqrt(128)
    out2 = jax.block_until_ready(input_embedding(ids2, emb_table2))
    assert jnp.allclose(out2, ref2, atol=1e-5, rtol=1e-5)

    print("KERNEL_OK")
</pallas_src>

<mosaic_0001>
module attributes {stable_mosaic.version = 11 : i64} {
  func.func @_embed_resident_kernel(%arg0: i32, %arg1: memref<32xi32, #tpu.memory_space<smem>>, %arg2: memref<64x32xf32, #tpu.memory_space<vmem>>, %arg3: memref<8x128xf32, #tpu.memory_space<vmem>>) attributes {dimension_semantics = [#tpu.dimension_semantics<parallel>], iteration_bounds = array<i64: 1>, scalar_prefetch = 1 : i64, scratch_operands = 0 : i64, tpu.core_type = #tpu.core_type<tc>, window_params = [{pipeline_mode = #tpu.pipeline_mode<synchronous>, transform_indices = @transform_0, window_bounds = array<i64: 64, 32>}, {transform_indices = @transform_1, window_bounds = array<i64: 8, 128>}]} {
    %c32_i32 = arith.constant 32 : i32
    %0 = arith.muli %arg0, %c32_i32 : i32
    %c0_i32 = arith.constant 0 : i32
    %c4_i32 = arith.constant 4 : i32
    %1 = arith.muli %c0_i32, %c4_i32 : i32
    %2 = arith.addi %0, %1 : i32
    %c0_i32_0 = arith.constant 0 : i32
    %3 = arith.addi %2, %c0_i32_0 : i32
    %4 = arith.index_cast %3 : i32 to index
    %5 = memref.load %arg1[%4] : memref<32xi32, #tpu.memory_space<smem>>
    %6 = arith.index_cast %5 : i32 to index
    %c0 = arith.constant 0 : index
    %7 = vector.load %arg2[%6, %c0] : memref<64x32xf32, #tpu.memory_space<vmem>>, vector<1x32xf32>
    %cst = arith.constant 5.65685415 : f32
    %8 = vector.broadcast %cst : f32 to vector<1x32xf32>
    %9 = arith.mulf %7, %8 : vector<1x32xf32>
    %10 = arith.index_cast %c0_i32 : i32 to index
    %c0_1 = arith.constant 0 : index
    %11 = vector.load %arg3[%10, %c0_1] : memref<8x128xf32, #tpu.memory_space<vmem>>, vector<1x32xf32>
    tpu.vector_store %arg3[%10, %c0_1], %9 {strides = array<i32>} : memref<8x128xf32, #tpu.memory_space<vmem>>, vector<1x32xf32>,
    %c4_i32_2 = arith.constant 4 : i32
    %12 = arith.muli %c0_i32, %c4_i32_2 : i32
    %13 = arith.addi %0, %12 : i32
    %c1_i32 = arith.constant 1 : i32
    %14 = arith.addi %13, %c1_i32 : i32
    %15 = arith.index_cast %14 : i32 to index
    %16 = memref.load %arg1[%15] : memref<32xi32, #tpu.memory_space<smem>>
    %17 = arith.index_cast %16 : i32 to index
    %c0_3 = arith.constant 0 : index
    %18 = vector.load %arg2[%17, %c0_3] : memref<64x32xf32, #tpu.memory_space<vmem>>, vector<1x32xf32>
    %cst_4 = arith.constant 5.65685415 : f32
    %19 = vector.broadcast %cst_4 : f32 to vector<1x32xf32>
    %20 = arith.mulf %18, %19 : vector<1x32xf32>
    %21 = arith.index_cast %c0_i32 : i32 to index
    %c32 = arith.constant 32 : index
    %22 = vector.load %arg3[%21, %c32] : memref<8x128xf32, #tpu.memory_space<vmem>>, vector<1x32xf32>
    tpu.vector_store %arg3[%21, %c32], %20 {strides = array<i32>} : memref<8x128xf32, #tpu.memory_space<vmem>>, vector<1x32xf32>,
    %c4_i32_5 = arith.constant 4 : i32
    %23 = arith.muli %c0_i32, %c4_i32_5 : i32
    %24 = arith.addi %0, %23 : i32
    %c2_i32 = arith.constant 2 : i32
    %25 = arith.addi %24, %c2_i32 : i32
    %26 = arith.index_cast %25 : i32 to index
    %27 = memref.load %arg1[%26] : memref<32xi32, #tpu.memory_space<smem>>
    %28 = arith.index_cast %27 : i32 to index
    %c0_6 = arith.constant 0 : index
    %29 = vector.load %arg2[%28, %c0_6] : memref<64x32xf32, #tpu.memory_space<vmem>>, vector<1x32xf32>
    %cst_7 = arith.constant 5.65685415 : f32
    %30 = vector.broadcast %cst_7 : f32 to vector<1x32xf32>
    %31 = arith.mulf %29, %30 : vector<1x32xf32>
    %32 = arith.index_cast %c0_i32 : i32 to index
    %c64 = arith.constant 64 : index
    %33 = vector.load %arg3[%32, %c64] : memref<8x128xf32, #tpu.memory_space<vmem>>, vector<1x32xf32>
    tpu.vector_store %arg3[%32, %c64], %31 {strides = array<i32>} : memref<8x128xf32, #tpu.memory_space<vmem>>, vector<1x32xf32>,
    %c4_i32_8 = arith.constant 4 : i32
    %34 = arith.muli %c0_i32, %c4_i32_8 : i32
    %35 = arith.addi %0, %34 : i32
    %c3_i32 = arith.constant 3 : i32
    %36 = arith.addi %35, %c3_i32 : i32
    %37 = arith.index_cast %36 : i32 to index
    %38 = memref.load %arg1[%37] : memref<32xi32, #tpu.memory_space<smem>>
    %39 = arith.index_cast %38 : i32 to index
    %c0_9 = arith.constant 0 : index
    %40 = vector.load %arg2[%39, %c0_9] : memref<64x32xf32, #tpu.memory_space<vmem>>, vector<1x32xf32>
    %cst_10 = arith.constant 5.65685415 : f32
    %41 = vector.broadcast %cst_10 : f32 to vector<1x32xf32>
    %42 = arith.mulf %40, %41 : vector<1x32xf32>
    %43 = arith.index_cast %c0_i32 : i32 to index
    %c96 = arith.constant 96 : index
    %44 = vector.load %arg3[%43, %c96] : memref<8x128xf32, #tpu.memory_space<vmem>>, vector<1x32xf32>
    tpu.vector_store %arg3[%43, %c96], %42 {strides = array<i32>} : memref<8x128xf32, #tpu.memory_space<vmem>>, vector<1x32xf32>,
    %c1_i32_11 = arith.constant 1 : i32
    %c4_i32_12 = arith.constant 4 : i32
    %45 = arith.muli %c1_i32_11, %c4_i32_12 : i32
    %46 = arith.addi %0, %45 : i32
    %c0_i32_13 = arith.constant 0 : i32
    %47 = arith.addi %46, %c0_i32_13 : i32
    %48 = arith.index_cast %47 : i32 to index
    %49 = memref.load %arg1[%48] : memref<32xi32, #tpu.memory_space<smem>>
    %50 = arith.index_cast %49 : i32 to index
    %c0_14 = arith.constant 0 : index
    %51 = vector.load %arg2[%50, %c0_14] : memref<64x32xf32, #tpu.memory_space<vmem>>, vector<1x32xf32>
    %cst_15 = arith.constant 5.65685415 : f32
    %52 = vector.broadcast %cst_15 : f32 to vector<1x32xf32>
    %53 = arith.mulf %51, %52 : vector<1x32xf32>
    %54 = arith.index_cast %c1_i32_11 : i32 to index
    %c0_16 = arith.constant 0 : index
    %55 = vector.load %arg3[%54, %c0_16] : memref<8x128xf32, #tpu.memory_space<vmem>>, vector<1x32xf32>
    tpu.vector_store %arg3[%54, %c0_16], %53 {strides = array<i32>} : memref<8x128xf32, #tpu.memory_space<vmem>>, vector<1x32xf32>,
    %c4_i32_17 = arith.constant 4 : i32
    %56 = arith.muli %c1_i32_11, %c4_i32_17 : i32
    %57 = arith.addi %0, %56 : i32
    %c1_i32_18 = arith.constant 1 : i32
    %58 = arith.addi %57, %c1_i32_18 : i32
    %59 = arith.index_cast %58 : i32 to index
    %60 = memref.load %arg1[%59] : memref<32xi32, #tpu.memory_space<smem>>
    %61 = arith.index_cast %60 : i32 to index
    %c0_19 = arith.constant 0 : index
    %62 = vector.load %arg2[%61, %c0_19] : memref<64x32xf32, #tpu.memory_space<vmem>>, vector<1x32xf32>
    %cst_20 = arith.constant 5.65685415 : f32
    %63 = vector.broadcast %cst_20 : f32 to vector<1x32xf32>
    %64 = arith.mulf %62, %63 : vector<1x32xf32>
    %65 = arith.index_cast %c1_i32_11 : i32 to index
    %c32_21 = arith.constant 32 : index
    %66 = vector.load %arg3[%65, %c32_21] : memref<8x128xf32, #tpu.memory_space<vmem>>, vector<1x32xf32>
    tpu.vector_store %arg3[%65, %c32_21], %64 {strides = array<i32>} : memref<8x128xf32, #tpu.memory_space<vmem>>, vector<1x32xf32>,
    %c4_i32_22 = arith.constant 4 : i32
    %67 = arith.muli %c1_i32_11, %c4_i32_22 : i32
    %68 = arith.addi %0, %67 : i32
    %c2_i32_23 = arith.constant 2 : i32
    %69 = arith.addi %68, %c2_i32_23 : i32
    %70 = arith.index_cast %69 : i32 to index
    %71 = memref.load %arg1[%70] : memref<32xi32, #tpu.memory_space<smem>>
    %72 = arith.index_cast %71 : i32 to index
    %c0_24 = arith.constant 0 : index
    %73 = vector.load %arg2[%72, %c0_24] : memref<64x32xf32, #tpu.memory_space<vmem>>, vector<1x32xf32>
    %cst_25 = arith.constant 5.65685415 : f32
    %74 = vector.broadcast %cst_25 : f32 to vector<1x32xf32>
    %75 = arith.mulf %73, %74 : vector<1x32xf32>
    %76 = arith.index_cast %c1_i32_11 : i32 to index
    %c64_26 = arith.constant 64 : index
    %77 = vector.load %arg3[%76, %c64_26] : memref<8x128xf32, #tpu.memory_space<vmem>>, vector<1x32xf32>
    tpu.vector_store %arg3[%76, %c64_26], %75 {strides = array<i32>} : memref<8x128xf32, #tpu.memory_space<vmem>>, vector<1x32xf32>,
    %c4_i32_27 = arith.constant 4 : i32
    %78 = arith.muli %c1_i32_11, %c4_i32_27 : i32
    %79 = arith.addi %0, %78 : i32
    %c3_i32_28 = arith.constant 3 : i32
    %80 = arith.addi %79, %c3_i32_28 : i32
    %81 = arith.index_cast %80 : i32 to index
    %82 = memref.load %arg1[%81] : memref<32xi32, #tpu.memory_space<smem>>
    %83 = arith.index_cast %82 : i32 to index
    %c0_29 = arith.constant 0 : index
    %84 = vector.load %arg2[%83, %c0_29] : memref<64x32xf32, #tpu.memory_space<vmem>>, vector<1x32xf32>
    %cst_30 = arith.constant 5.65685415 : f32
    %85 = vector.broadcast %cst_30 : f32 to vector<1x32xf32>
    %86 = arith.mulf %84, %85 : vector<1x32xf32>
    %87 = arith.index_cast %c1_i32_11 : i32 to index
    %c96_31 = arith.constant 96 : index
    %88 = vector.load %arg3[%87, %c96_31] : memref<8x128xf32, #tpu.memory_space<vmem>>, vector<1x32xf32>
    tpu.vector_store %arg3[%87, %c96_31], %86 {strides = array<i32>} : memref<8x128xf32, #tpu.memory_space<vmem>>, vector<1x32xf32>,
    %c2_i32_32 = arith.constant 2 : i32
    %c4_i32_33 = arith.constant 4 : i32
    %89 = arith.muli %c2_i32_32, %c4_i32_33 : i32
    %90 = arith.addi %0, %89 : i32
    %c0_i32_34 = arith.constant 0 : i32
    %91 = arith.addi %90, %c0_i32_34 : i32
    %92 = arith.index_cast %91 : i32 to index
    %93 = memref.load %arg1[%92] : memref<32xi32, #tpu.memory_space<smem>>
    %94 = arith.index_cast %93 : i32 to index
    %c0_35 = arith.constant 0 : index
    %95 = vector.load %arg2[%94, %c0_35] : memref<64x32xf32, #tpu.memory_space<vmem>>, vector<1x32xf32>
    %cst_36 = arith.constant 5.65685415 : f32
    %96 = vector.broadcast %cst_36 : f32 to vector<1x32xf32>
    %97 = arith.mulf %95, %96 : vector<1x32xf32>
    %98 = arith.index_cast %c2_i32_32 : i32 to index
    %c0_37 = arith.constant 0 : index
    %99 = vector.load %arg3[%98, %c0_37] : memref<8x128xf32, #tpu.memory_space<vmem>>, vector<1x32xf32>
    tpu.vector_store %arg3[%98, %c0_37], %97 {strides = array<i32>} : memref<8x128xf32, #tpu.memory_space<vmem>>, vector<1x32xf32>,
    %c4_i32_38 = arith.constant 4 : i32
    %100 = arith.muli %c2_i32_32, %c4_i32_38 : i32
    %101 = arith.addi %0, %100 : i32
    %c1_i32_39 = arith.constant 1 : i32
    %102 = arith.addi %101, %c1_i32_39 : i32
    %103 = arith.index_cast %102 : i32 to index
    %104 = memref.load %arg1[%103] : memref<32xi32, #tpu.memory_space<smem>>
    %105 = arith.index_cast %104 : i32 to index
    %c0_40 = arith.constant 0 : index
    %106 = vector.load %arg2[%105, %c0_40] : memref<64x32xf32, #tpu.memory_space<vmem>>, vector<1x32xf32>
    %cst_41 = arith.constant 5.65685415 : f32
    %107 = vector.broadcast %cst_41 : f32 to vector<1x32xf32>
    %108 = arith.mulf %106, %107 : vector<1x32xf32>
    %109 = arith.index_cast %c2_i32_32 : i32 to index
    %c32_42 = arith.constant 32 : index
    %110 = vector.load %arg3[%109, %c32_42] : memref<8x128xf32, #tpu.memory_space<vmem>>, vector<1x32xf32>
    tpu.vector_store %arg3[%109, %c32_42], %108 {strides = array<i32>} : memref<8x128xf32, #tpu.memory_space<vmem>>, vector<1x32xf32>,
    %c4_i32_43 = arith.constant 4 : i32
    %111 = arith.muli %c2_i32_32, %c4_i32_43 : i32
    %112 = arith.addi %0, %111 : i32
    %c2_i32_44 = arith.constant 2 : i32
    %113 = arith.addi %112, %c2_i32_44 : i32
    %114 = arith.index_cast %113 : i32 to index
    %115 = memref.load %arg1[%114] : memref<32xi32, #tpu.memory_space<smem>>
    %116 = arith.index_cast %115 : i32 to index
    %c0_45 = arith.constant 0 : index
    %117 = vector.load %arg2[%116, %c0_45] : memref<64x32xf32, #tpu.memory_space<vmem>>, vector<1x32xf32>
    %cst_46 = arith.constant 5.65685415 : f32
    %118 = vector.broadcast %cst_46 : f32 to vector<1x32xf32>
    %119 = arith.mulf %117, %118 : vector<1x32xf32>
    %120 = arith.index_cast %c2_i32_32 : i32 to index
    %c64_47 = arith.constant 64 : index
    %121 = vector.load %arg3[%120, %c64_47] : memref<8x128xf32, #tpu.memory_space<vmem>>, vector<1x32xf32>
    tpu.vector_store %arg3[%120, %c64_47], %119 {strides = array<i32>} : memref<8x128xf32, #tpu.memory_space<vmem>>, vector<1x32xf32>,
    %c4_i32_48 = arith.constant 4 : i32
    %122 = arith.muli %c2_i32_32, %c4_i32_48 : i32
    %123 = arith.addi %0, %122 : i32
    %c3_i32_49 = arith.constant 3 : i32
    %124 = arith.addi %123, %c3_i32_49 : i32
    %125 = arith.index_cast %124 : i32 to index
    %126 = memref.load %arg1[%125] : memref<32xi32, #tpu.memory_space<smem>>
    %127 = arith.index_cast %126 : i32 to index
    %c0_50 = arith.constant 0 : index
    %128 = vector.load %arg2[%127, %c0_50] : memref<64x32xf32, #tpu.memory_space<vmem>>, vector<1x32xf32>
    %cst_51 = arith.constant 5.65685415 : f32
    %129 = vector.broadcast %cst_51 : f32 to vector<1x32xf32>
    %130 = arith.mulf %128, %129 : vector<1x32xf32>
    %131 = arith.index_cast %c2_i32_32 : i32 to index
    %c96_52 = arith.constant 96 : index
    %132 = vector.load %arg3[%131, %c96_52] : memref<8x128xf32, #tpu.memory_space<vmem>>, vector<1x32xf32>
    tpu.vector_store %arg3[%131, %c96_52], %130 {strides = array<i32>} : memref<8x128xf32, #tpu.memory_space<vmem>>, vector<1x32xf32>,
    %c3_i32_53 = arith.constant 3 : i32
    %c4_i32_54 = arith.constant 4 : i32
    %133 = arith.muli %c3_i32_53, %c4_i32_54 : i32
    %134 = arith.addi %0, %133 : i32
    %c0_i32_55 = arith.constant 0 : i32
    %135 = arith.addi %134, %c0_i32_55 : i32
    %136 = arith.index_cast %135 : i32 to index
    %137 = memref.load %arg1[%136] : memref<32xi32, #tpu.memory_space<smem>>
    %138 = arith.index_cast %137 : i32 to index
    %c0_56 = arith.constant 0 : index
    %139 = vector.load %arg2[%138, %c0_56] : memref<64x32xf32, #tpu.memory_space<vmem>>, vector<1x32xf32>
    %cst_57 = arith.constant 5.65685415 : f32
    %140 = vector.broadcast %cst_57 : f32 to vector<1x32xf32>
    %141 = arith.mulf %139, %140 : vector<1x32xf32>
    %142 = arith.index_cast %c3_i32_53 : i32 to index
    %c0_58 = arith.constant 0 : index
    %143 = vector.load %arg3[%142, %c0_58] : memref<8x128xf32, #tpu.memory_space<vmem>>, vector<1x32xf32>
    tpu.vector_store %arg3[%142, %c0_58], %141 {strides = array<i32>} : memref<8x128xf32, #tpu.memory_space<vmem>>, vector<1x32xf32>,
    %c4_i32_59 = arith.constant 4 : i32
    %144 = arith.muli %c3_i32_53, %c4_i32_59 : i32
    %145 = arith.addi %0, %144 : i32
    %c1_i32_60 = arith.constant 1 : i32
    %146 = arith.addi %145, %c1_i32_60 : i32
    %147 = arith.index_cast %146 : i32 to index
    %148 = memref.load %arg1[%147] : memref<32xi32, #tpu.memory_space<smem>>
    %149 = arith.index_cast %148 : i32 to index
    %c0_61 = arith.constant 0 : index
    %150 = vector.load %arg2[%149, %c0_61] : memref<64x32xf32, #tpu.memory_space<vmem>>, vector<1x32xf32>
    %cst_62 = arith.constant 5.65685415 : f32
    %151 = vector.broadcast %cst_62 : f32 to vector<1x32xf32>
    %152 = arith.mulf %150, %151 : vector<1x32xf32>
    %153 = arith.index_cast %c3_i32_53 : i32 to index
    %c32_63 = arith.constant 32 : index
    %154 = vector.load %arg3[%153, %c32_63] : memref<8x128xf32, #tpu.memory_space<vmem>>, vector<1x32xf32>
    tpu.vector_store %arg3[%153, %c32_63], %152 {strides = array<i32>} : memref<8x128xf32, #tpu.memory_space<vmem>>, vector<1x32xf32>,
    %c4_i32_64 = arith.constant 4 : i32
    %155 = arith.muli %c3_i32_53, %c4_i32_64 : i32
    %156 = arith.addi %0, %155 : i32
    %c2_i32_65 = arith.constant 2 : i32
    %157 = arith.addi %156, %c2_i32_65 : i32
    %158 = arith.index_cast %157 : i32 to index
    %159 = memref.load %arg1[%158] : memref<32xi32, #tpu.memory_space<smem>>
    %160 = arith.index_cast %159 : i32 to index
    %c0_66 = arith.constant 0 : index
    %161 = vector.load %arg2[%160, %c0_66] : memref<64x32xf32, #tpu.memory_space<vmem>>, vector<1x32xf32>
    %cst_67 = arith.constant 5.65685415 : f32
    %162 = vector.broadcast %cst_67 : f32 to vector<1x32xf32>
    %163 = arith.mulf %161, %162 : vector<1x32xf32>
    %164 = arith.index_cast %c3_i32_53 : i32 to index
    %c64_68 = arith.constant 64 : index
    %165 = vector.load %arg3[%164, %c64_68] : memref<8x128xf32, #tpu.memory_space<vmem>>, vector<1x32xf32>
    tpu.vector_store %arg3[%164, %c64_68], %163 {strides = array<i32>} : memref<8x128xf32, #tpu.memory_space<vmem>>, vector<1x32xf32>,
    %c4_i32_69 = arith.constant 4 : i32
    %166 = arith.muli %c3_i32_53, %c4_i32_69 : i32
    %167 = arith.addi %0, %166 : i32
    %c3_i32_70 = arith.constant 3 : i32
    %168 = arith.addi %167, %c3_i32_70 : i32
    %169 = arith.index_cast %168 : i32 to index
    %170 = memref.load %arg1[%169] : memref<32xi32, #tpu.memory_space<smem>>
    %171 = arith.index_cast %170 : i32 to index
    %c0_71 = arith.constant 0 : index
    %172 = vector.load %arg2[%171, %c0_71] : memref<64x32xf32, #tpu.memory_space<vmem>>, vector<1x32xf32>
    %cst_72 = arith.constant 5.65685415 : f32
    %173 = vector.broadcast %cst_72 : f32 to vector<1x32xf32>
    %174 = arith.mulf %172, %173 : vector<1x32xf32>
    %175 = arith.index_cast %c3_i32_53 : i32 to index
    %c96_73 = arith.constant 96 : index
    %176 = vector.load %arg3[%175, %c96_73] : memref<8x128xf32, #tpu.memory_space<vmem>>, vector<1x32xf32>
    tpu.vector_store %arg3[%175, %c96_73], %174 {strides = array<i32>} : memref<8x128xf32, #tpu.memory_space<vmem>>, vector<1x32xf32>,
    %c4_i32_74 = arith.constant 4 : i32
    %c4_i32_75 = arith.constant 4 : i32
    %177 = arith.muli %c4_i32_74, %c4_i32_75 : i32
    %178 = arith.addi %0, %177 : i32
    %c0_i32_76 = arith.constant 0 : i32
    %179 = arith.addi %178, %c0_i32_76 : i32
    %180 = arith.index_cast %179 : i32 to index
    %181 = memref.load %arg1[%180] : memref<32xi32, #tpu.memory_space<smem>>
    %182 = arith.index_cast %181 : i32 to index
    %c0_77 = arith.constant 0 : index
    %183 = vector.load %arg2[%182, %c0_77] : memref<64x32xf32, #tpu.memory_space<vmem>>, vector<1x32xf32>
    %cst_78 = arith.constant 5.65685415 : f32
    %184 = vector.broadcast %cst_78 : f32 to vector<1x32xf32>
    %185 = arith.mulf %183, %184 : vector<1x32xf32>
    %186 = arith.index_cast %c4_i32_74 : i32 to index
    %c0_79 = arith.constant 0 : index
    %187 = vector.load %arg3[%186, %c0_79] : memref<8x128xf32, #tpu.memory_space<vmem>>, vector<1x32xf32>
    tpu.vector_store %arg3[%186, %c0_79], %185 {strides = array<i32>} : memref<8x128xf32, #tpu.memory_space<vmem>>, vector<1x32xf32>,
    %c4_i32_80 = arith.constant 4 : i32
    %188 = arith.muli %c4_i32_74, %c4_i32_80 : i32
    %189 = arith.addi %0, %188 : i32
    %c1_i32_81 = arith.constant 1 : i32
    %190 = arith.addi %189, %c1_i32_81 : i32
    %191 = arith.index_cast %190 : i32 to index
    %192 = memref.load %arg1[%191] : memref<32xi32, #tpu.memory_space<smem>>
    %193 = arith.index_cast %192 : i32 to index
    %c0_82 = arith.constant 0 : index
    %194 = vector.load %arg2[%193, %c0_82] : memref<64x32xf32, #tpu.memory_space<vmem>>, vector<1x32xf32>
    %cst_83 = arith.constant 5.65685415 : f32
    %195 = vector.broadcast %cst_83 : f32 to vector<1x32xf32>
    %196 = arith.mulf %194, %195 : vector<1x32xf32>
    %197 = arith.index_cast %c4_i32_74 : i32 to index
    %c32_84 = arith.constant 32 : index
    %198 = vector.load %arg3[%197, %c32_84] : memref<8x128xf32, #tpu.memory_space<vmem>>, vector<1x32xf32>
    tpu.vector_store %arg3[%197, %c32_84], %196 {strides = array<i32>} : memref<8x128xf32, #tpu.memory_space<vmem>>, vector<1x32xf32>,
    %c4_i32_85 = arith.constant 4 : i32
    %199 = arith.muli %c4_i32_74, %c4_i32_85 : i32
    %200 = arith.addi %0, %199 : i32
    %c2_i32_86 = arith.constant 2 : i32
    %201 = arith.addi %200, %c2_i32_86 : i32
    %202 = arith.index_cast %201 : i32 to index
    %203 = memref.load %arg1[%202] : memref<32xi32, #tpu.memory_space<smem>>
    %204 = arith.index_cast %203 : i32 to index
    %c0_87 = arith.constant 0 : index
    %205 = vector.load %arg2[%204, %c0_87] : memref<64x32xf32, #tpu.memory_space<vmem>>, vector<1x32xf32>
    %cst_88 = arith.constant 5.65685415 : f32
    %206 = vector.broadcast %cst_88 : f32 to vector<1x32xf32>
    %207 = arith.mulf %205, %206 : vector<1x32xf32>
    %208 = arith.index_cast %c4_i32_74 : i32 to index
    %c64_89 = arith.constant 64 : index
    %209 = vector.load %arg3[%208, %c64_89] : memref<8x128xf32, #tpu.memory_space<vmem>>, vector<1x32xf32>
    tpu.vector_store %arg3[%208, %c64_89], %207 {strides = array<i32>} : memref<8x128xf32, #tpu.memory_space<vmem>>, vector<1x32xf32>,
    %c4_i32_90 = arith.constant 4 : i32
    %210 = arith.muli %c4_i32_74, %c4_i32_90 : i32
    %211 = arith.addi %0, %210 : i32
    %c3_i32_91 = arith.constant 3 : i32
    %212 = arith.addi %211, %c3_i32_91 : i32
    %213 = arith.index_cast %212 : i32 to index
    %214 = memref.load %arg1[%213] : memref<32xi32, #tpu.memory_space<smem>>
    %215 = arith.index_cast %214 : i32 to index
    %c0_92 = arith.constant 0 : index
    %216 = vector.load %arg2[%215, %c0_92] : memref<64x32xf32, #tpu.memory_space<vmem>>, vector<1x32xf32>
    %cst_93 = arith.constant 5.65685415 : f32
    %217 = vector.broadcast %cst_93 : f32 to vector<1x32xf32>
    %218 = arith.mulf %216, %217 : vector<1x32xf32>
    %219 = arith.index_cast %c4_i32_74 : i32 to index
    %c96_94 = arith.constant 96 : index
    %220 = vector.load %arg3[%219, %c96_94] : memref<8x128xf32, #tpu.memory_space<vmem>>, vector<1x32xf32>
    tpu.vector_store %arg3[%219, %c96_94], %218 {strides = array<i32>} : memref<8x128xf32, #tpu.memory_space<vmem>>, vector<1x32xf32>,
    %c5_i32 = arith.constant 5 : i32
    %c4_i32_95 = arith.constant 4 : i32
    %221 = arith.muli %c5_i32, %c4_i32_95 : i32
    %222 = arith.addi %0, %221 : i32
    %c0_i32_96 = arith.constant 0 : i32
    %223 = arith.addi %222, %c0_i32_96 : i32
    %224 = arith.index_cast %223 : i32 to index
    %225 = memref.load %arg1[%224] : memref<32xi32, #tpu.memory_space<smem>>
    %226 = arith.index_cast %225 : i32 to index
    %c0_97 = arith.constant 0 : index
    %227 = vector.load %arg2[%226, %c0_97] : memref<64x32xf32, #tpu.memory_space<vmem>>, vector<1x32xf32>
    %cst_98 = arith.constant 5.65685415 : f32
    %228 = vector.broadcast %cst_98 : f32 to vector<1x32xf32>
    %229 = arith.mulf %227, %228 : vector<1x32xf32>
    %230 = arith.index_cast %c5_i32 : i32 to index
    %c0_99 = arith.constant 0 : index
    %231 = vector.load %arg3[%230, %c0_99] : memref<8x128xf32, #tpu.memory_space<vmem>>, vector<1x32xf32>
    tpu.vector_store %arg3[%230, %c0_99], %229 {strides = array<i32>} : memref<8x128xf32, #tpu.memory_space<vmem>>, vector<1x32xf32>,
    %c4_i32_100 = arith.constant 4 : i32
    %232 = arith.muli %c5_i32, %c4_i32_100 : i32
    %233 = arith.addi %0, %232 : i32
    %c1_i32_101 = arith.constant 1 : i32
    %234 = arith.addi %233, %c1_i32_101 : i32
    %235 = arith.index_cast %234 : i32 to index
    %236 = memref.load %arg1[%235] : memref<32xi32, #tpu.memory_space<smem>>
    %237 = arith.index_cast %236 : i32 to index
    %c0_102 = arith.constant 0 : index
    %238 = vector.load %arg2[%237, %c0_102] : memref<64x32xf32, #tpu.memory_space<vmem>>, vector<1x32xf32>
    %cst_103 = arith.constant 5.65685415 : f32
    %239 = vector.broadcast %cst_103 : f32 to vector<1x32xf32>
    %240 = arith.mulf %238, %239 : vector<1x32xf32>
    %241 = arith.index_cast %c5_i32 : i32 to index
    %c32_104 = arith.constant 32 : index
    %242 = vector.load %arg3[%241, %c32_104] : memref<8x128xf32, #tpu.memory_space<vmem>>, vector<1x32xf32>
    tpu.vector_store %arg3[%241, %c32_104], %240 {strides = array<i32>} : memref<8x128xf32, #tpu.memory_space<vmem>>, vector<1x32xf32>,
    %c4_i32_105 = arith.constant 4 : i32
    %243 = arith.muli %c5_i32, %c4_i32_105 : i32
    %244 = arith.addi %0, %243 : i32
    %c2_i32_106 = arith.constant 2 : i32
    %245 = arith.addi %244, %c2_i32_106 : i32
    %246 = arith.index_cast %245 : i32 to index
    %247 = memref.load %arg1[%246] : memref<32xi32, #tpu.memory_space<smem>>
    %248 = arith.index_cast %247 : i32 to index
    %c0_107 = arith.constant 0 : index
    %249 = vector.load %arg2[%248, %c0_107] : memref<64x32xf32, #tpu.memory_space<vmem>>, vector<1x32xf32>
    %cst_108 = arith.constant 5.65685415 : f32
    %250 = vector.broadcast %cst_108 : f32 to vector<1x32xf32>
    %251 = arith.mulf %249, %250 : vector<1x32xf32>
    %252 = arith.index_cast %c5_i32 : i32 to index
    %c64_109 = arith.constant 64 : index
    %253 = vector.load %arg3[%252, %c64_109] : memref<8x128xf32, #tpu.memory_space<vmem>>, vector<1x32xf32>
    tpu.vector_store %arg3[%252, %c64_109], %251 {strides = array<i32>} : memref<8x128xf32, #tpu.memory_space<vmem>>, vector<1x32xf32>,
    %c4_i32_110 = arith.constant 4 : i32
    %254 = arith.muli %c5_i32, %c4_i32_110 : i32
    %255 = arith.addi %0, %254 : i32
    %c3_i32_111 = arith.constant 3 : i32
    %256 = arith.addi %255, %c3_i32_111 : i32
    %257 = arith.index_cast %256 : i32 to index
    %258 = memref.load %arg1[%257] : memref<32xi32, #tpu.memory_space<smem>>
    %259 = arith.index_cast %258 : i32 to index
    %c0_112 = arith.constant 0 : index
    %260 = vector.load %arg2[%259, %c0_112] : memref<64x32xf32, #tpu.memory_space<vmem>>, vector<1x32xf32>
    %cst_113 = arith.constant 5.65685415 : f32
    %261 = vector.broadcast %cst_113 : f32 to vector<1x32xf32>
    %262 = arith.mulf %260, %261 : vector<1x32xf32>
    %263 = arith.index_cast %c5_i32 : i32 to index
    %c96_114 = arith.constant 96 : index
    %264 = vector.load %arg3[%263, %c96_114] : memref<8x128xf32, #tpu.memory_space<vmem>>, vector<1x32xf32>
    tpu.vector_store %arg3[%263, %c96_114], %262 {strides = array<i32>} : memref<8x128xf32, #tpu.memory_space<vmem>>, vector<1x32xf32>,
    %c6_i32 = arith.constant 6 : i32
    %c4_i32_115 = arith.constant 4 : i32
    %265 = arith.muli %c6_i32, %c4_i32_115 : i32
    %266 = arith.addi %0, %265 : i32
    %c0_i32_116 = arith.constant 0 : i32
    %267 = arith.addi %266, %c0_i32_116 : i32
    %268 = arith.index_cast %267 : i32 to index
    %269 = memref.load %arg1[%268] : memref<32xi32, #tpu.memory_space<smem>>
    %270 = arith.index_cast %269 : i32 to index
    %c0_117 = arith.constant 0 : index
    %271 = vector.load %arg2[%270, %c0_117] : memref<64x32xf32, #tpu.memory_space<vmem>>, vector<1x32xf32>
    %cst_118 = arith.constant 5.65685415 : f32
    %272 = vector.broadcast %cst_118 : f32 to vector<1x32xf32>
    %273 = arith.mulf %271, %272 : vector<1x32xf32>
    %274 = arith.index_cast %c6_i32 : i32 to index
    %c0_119 = arith.constant 0 : index
    %275 = vector.load %arg3[%274, %c0_119] : memref<8x128xf32, #tpu.memory_space<vmem>>, vector<1x32xf32>
    tpu.vector_store %arg3[%274, %c0_119], %273 {strides = array<i32>} : memref<8x128xf32, #tpu.memory_space<vmem>>, vector<1x32xf32>,
    %c4_i32_120 = arith.constant 4 : i32
    %276 = arith.muli %c6_i32, %c4_i32_120 : i32
    %277 = arith.addi %0, %276 : i32
    %c1_i32_121 = arith.constant 1 : i32
    %278 = arith.addi %277, %c1_i32_121 : i32
    %279 = arith.index_cast %278 : i32 to index
    %280 = memref.load %arg1[%279] : memref<32xi32, #tpu.memory_space<smem>>
    %281 = arith.index_cast %280 : i32 to index
    %c0_122 = arith.constant 0 : index
    %282 = vector.load %arg2[%281, %c0_122] : memref<64x32xf32, #tpu.memory_space<vmem>>, vector<1x32xf32>
    %cst_123 = arith.constant 5.65685415 : f32
    %283 = vector.broadcast %cst_123 : f32 to vector<1x32xf32>
    %284 = arith.mulf %282, %283 : vector<1x32xf32>
    %285 = arith.index_cast %c6_i32 : i32 to index
    %c32_124 = arith.constant 32 : index
    %286 = vector.load %arg3[%285, %c32_124] : memref<8x128xf32, #tpu.memory_space<vmem>>, vector<1x32xf32>
    tpu.vector_store %arg3[%285, %c32_124], %284 {strides = array<i32>} : memref<8x128xf32, #tpu.memory_space<vmem>>, vector<1x32xf32>,
    %c4_i32_125 = arith.constant 4 : i32
    %287 = arith.muli %c6_i32, %c4_i32_125 : i32
    %288 = arith.addi %0, %287 : i32
    %c2_i32_126 = arith.constant 2 : i32
    %289 = arith.addi %288, %c2_i32_126 : i32
    %290 = arith.index_cast %289 : i32 to index
    %291 = memref.load %arg1[%290] : memref<32xi32, #tpu.memory_space<smem>>
    %292 = arith.index_cast %291 : i32 to index
    %c0_127 = arith.constant 0 : index
    %293 = vector.load %arg2[%292, %c0_127] : memref<64x32xf32, #tpu.memory_space<vmem>>, vector<1x32xf32>
    %cst_128 = arith.constant 5.65685415 : f32
    %294 = vector.broadcast %cst_128 : f32 to vector<1x32xf32>
    %295 = arith.mulf %293, %294 : vector<1x32xf32>
    %296 = arith.index_cast %c6_i32 : i32 to index
    %c64_129 = arith.constant 64 : index
    %297 = vector.load %arg3[%296, %c64_129] : memref<8x128xf32, #tpu.memory_space<vmem>>, vector<1x32xf32>
    tpu.vector_store %arg3[%296, %c64_129], %295 {strides = array<i32>} : memref<8x128xf32, #tpu.memory_space<vmem>>, vector<1x32xf32>,
    %c4_i32_130 = arith.constant 4 : i32
    %298 = arith.muli %c6_i32, %c4_i32_130 : i32
    %299 = arith.addi %0, %298 : i32
    %c3_i32_131 = arith.constant 3 : i32
    %300 = arith.addi %299, %c3_i32_131 : i32
    %301 = arith.index_cast %300 : i32 to index
    %302 = memref.load %arg1[%301] : memref<32xi32, #tpu.memory_space<smem>>
    %303 = arith.index_cast %302 : i32 to index
    %c0_132 = arith.constant 0 : index
    %304 = vector.load %arg2[%303, %c0_132] : memref<64x32xf32, #tpu.memory_space<vmem>>, vector<1x32xf32>
    %cst_133 = arith.constant 5.65685415 : f32
    %305 = vector.broadcast %cst_133 : f32 to vector<1x32xf32>
    %306 = arith.mulf %304, %305 : vector<1x32xf32>
    %307 = arith.index_cast %c6_i32 : i32 to index
    %c96_134 = arith.constant 96 : index
    %308 = vector.load %arg3[%307, %c96_134] : memref<8x128xf32, #tpu.memory_space<vmem>>, vector<1x32xf32>
    tpu.vector_store %arg3[%307, %c96_134], %306 {strides = array<i32>} : memref<8x128xf32, #tpu.memory_space<vmem>>, vector<1x32xf32>,
    %c7_i32 = arith.constant 7 : i32
    %c4_i32_135 = arith.constant 4 : i32
    %309 = arith.muli %c7_i32, %c4_i32_135 : i32
    %310 = arith.addi %0, %309 : i32
    %c0_i32_136 = arith.constant 0 : i32
    %311 = arith.addi %310, %c0_i32_136 : i32
    %312 = arith.index_cast %311 : i32 to index
    %313 = memref.load %arg1[%312] : memref<32xi32, #tpu.memory_space<smem>>
    %314 = arith.index_cast %313 : i32 to index
    %c0_137 = arith.constant 0 : index
    %315 = vector.load %arg2[%314, %c0_137] : memref<64x32xf32, #tpu.memory_space<vmem>>, vector<1x32xf32>
    %cst_138 = arith.constant 5.65685415 : f32
    %316 = vector.broadcast %cst_138 : f32 to vector<1x32xf32>
    %317 = arith.mulf %315, %316 : vector<1x32xf32>
    %318 = arith.index_cast %c7_i32 : i32 to index
    %c0_139 = arith.constant 0 : index
    %319 = vector.load %arg3[%318, %c0_139] : memref<8x128xf32, #tpu.memory_space<vmem>>, vector<1x32xf32>
    tpu.vector_store %arg3[%318, %c0_139], %317 {strides = array<i32>} : memref<8x128xf32, #tpu.memory_space<vmem>>, vector<1x32xf32>,
    %c4_i32_140 = arith.constant 4 : i32
    %320 = arith.muli %c7_i32, %c4_i32_140 : i32
    %321 = arith.addi %0, %320 : i32
    %c1_i32_141 = arith.constant 1 : i32
    %322 = arith.addi %321, %c1_i32_141 : i32
    %323 = arith.index_cast %322 : i32 to index
    %324 = memref.load %arg1[%323] : memref<32xi32, #tpu.memory_space<smem>>
    %325 = arith.index_cast %324 : i32 to index
    %c0_142 = arith.constant 0 : index
    %326 = vector.load %arg2[%325, %c0_142] : memref<64x32xf32, #tpu.memory_space<vmem>>, vector<1x32xf32>
    %cst_143 = arith.constant 5.65685415 : f32
    %327 = vector.broadcast %cst_143 : f32 to vector<1x32xf32>
    %328 = arith.mulf %326, %327 : vector<1x32xf32>
    %329 = arith.index_cast %c7_i32 : i32 to index
    %c32_144 = arith.constant 32 : index
    %330 = vector.load %arg3[%329, %c32_144] : memref<8x128xf32, #tpu.memory_space<vmem>>, vector<1x32xf32>
    tpu.vector_store %arg3[%329, %c32_144], %328 {strides = array<i32>} : memref<8x128xf32, #tpu.memory_space<vmem>>, vector<1x32xf32>,
    %c4_i32_145 = arith.constant 4 : i32
    %331 = arith.muli %c7_i32, %c4_i32_145 : i32
    %332 = arith.addi %0, %331 : i32
    %c2_i32_146 = arith.constant 2 : i32
    %333 = arith.addi %332, %c2_i32_146 : i32
    %334 = arith.index_cast %333 : i32 to index
    %335 = memref.load %arg1[%334] : memref<32xi32, #tpu.memory_space<smem>>
    %336 = arith.index_cast %335 : i32 to index
    %c0_147 = arith.constant 0 : index
    %337 = vector.load %arg2[%336, %c0_147] : memref<64x32xf32, #tpu.memory_space<vmem>>, vector<1x32xf32>
    %cst_148 = arith.constant 5.65685415 : f32
    %338 = vector.broadcast %cst_148 : f32 to vector<1x32xf32>
    %339 = arith.mulf %337, %338 : vector<1x32xf32>
    %340 = arith.index_cast %c7_i32 : i32 to index
    %c64_149 = arith.constant 64 : index
    %341 = vector.load %arg3[%340, %c64_149] : memref<8x128xf32, #tpu.memory_space<vmem>>, vector<1x32xf32>
    tpu.vector_store %arg3[%340, %c64_149], %339 {strides = array<i32>} : memref<8x128xf32, #tpu.memory_space<vmem>>, vector<1x32xf32>,
    %c4_i32_150 = arith.constant 4 : i32
    %342 = arith.muli %c7_i32, %c4_i32_150 : i32
    %343 = arith.addi %0, %342 : i32
    %c3_i32_151 = arith.constant 3 : i32
    %344 = arith.addi %343, %c3_i32_151 : i32
    %345 = arith.index_cast %344 : i32 to index
    %346 = memref.load %arg1[%345] : memref<32xi32, #tpu.memory_space<smem>>
    %347 = arith.index_cast %346 : i32 to index
    %c0_152 = arith.constant 0 : index
    %348 = vector.load %arg2[%347, %c0_152] : memref<64x32xf32, #tpu.memory_space<vmem>>, vector<1x32xf32>
    %cst_153 = arith.constant 5.65685415 : f32
    %349 = vector.broadcast %cst_153 : f32 to vector<1x32xf32>
    %350 = arith.mulf %348, %349 : vector<1x32xf32>
    %351 = arith.index_cast %c7_i32 : i32 to index
    %c96_154 = arith.constant 96 : index
    %352 = vector.load %arg3[%351, %c96_154] : memref<8x128xf32, #tpu.memory_space<vmem>>, vector<1x32xf32>
    tpu.vector_store %arg3[%351, %c96_154], %350 {strides = array<i32>} : memref<8x128xf32, #tpu.memory_space<vmem>>, vector<1x32xf32>,
    %c8_i32 = arith.constant 8 : i32
    return
  }
  func.func @transform_0(%arg0: i32, %arg1: memref<32xi32, #tpu.memory_space<smem>>) -> (i32, i32) {
    %c0_i32 = arith.constant 0 : i32
    %c0_i32_0 = arith.constant 0 : i32
    %c0_i32_1 = arith.constant 0 : i32
    return %c0_i32, %c0_i32_0 : i32, i32
  }
  func.func @transform_1(%arg0: i32, %arg1: memref<32xi32, #tpu.memory_space<smem>>) -> (i32, i32) {
    %c0_i32 = arith.constant 0 : i32
    %c0_i32_0 = arith.constant 0 : i32
    return %arg0, %c0_i32 : i32, i32
  }
}

</mosaic_0001>

<llo_original>
// kernel: tpu_custom_call.1
$region0: #{tpu_custom_call.1}
  #allocation0 [shape = 'u32[]', space=smem, size = 0x4, offset = 0x4, fixed_abs, tag = 'smem constant byte address 0x4 - core index']
  #allocation1 [shape = 'u32[72,128]{1,0:T(1,128)}', space=vmem, size = 0x9000, scoped, tag = 'internal scratch']
  #allocation2 [shape = 's32[1]{0}', space=sflag, size = 0x4, scoped, tag = 'scoped memory for tpu_custom_call.1']
  #allocation3 [shape = 'u8[512]{0}', space=smem, size = 0x200, scoped, tag = 'prefetched SMEM operand 0']
  %s0 = inlined_call_operand.vmem [shape: s32[32], index: 0, kind: input, shape index: {}]
  %s1 = inlined_call_operand.vmem [shape: f32[64,32], index: 1, kind: input, shape index: {}]
  %s2 = inlined_call_operand.hbm [shape: f32[8,128], index: 2, kind: output, shape index: {}]
  %s3 = sld [smem:[#allocation0]]
  $region14: #{tpu_custom_call.1} parent=0
    _
  %s5 = ssub.s32 1, %s3
  %s6 = scalar_select 0, %s5, %s3
  %s8 = sshll.u32 %s0, 4
  %s9 = int_to_ptr.vmem [resolvable:$true] %s8
  %11 = dma.vmem_to_smem %s9, 16, [#allocation3], [#allocation2]
  %13 = dma.done [#allocation2], 16
  %14 = sfence
  $region1: #{tpu_custom_call.1} parent=0
    #allocation4 [shape = 'u8[4096]{0}', space=vmem, size = 0x1000, scoped, tag = 'output window, operand 0, single buffered']
    #allocation5 [shape = 's32[1]{0}', space=sflag, size = 0x4, scoped, tag = 'scoped memory for tpu_custom_call.1']
    %15 = vsyncpa [#allocation5], 0
    // Predicated region
    $region2: #{tpu_custom_call.1} parent=1 // pred_check
      _
    $region3: #{tpu_custom_call.1} parent=1 // pred_check_branch
      %17 = sbr.rel (0) target = $region5
    $region4: #{tpu_custom_call.1} parent=1 // pred_region
      _
    $region5: #{tpu_custom_call.1} parent=1 // pred_fallthru
      _
    %s18 = smul.u32 0, 32
    %s19 = sld [smem:[#allocation3 + %s18]]
    %s20 = scalar_lea.vmem %s1, %s19
    %v21 = vld [vmem:[%s20] sm:$0x1]
    %v22 = vmul.f32 %v21, 5.656854
    %vm23 = vcmask 253952
    %24 = vst.msk [vmem:[#allocation4] sm:$0x1] %vm23, %v22
    %s25 = sadd.s32 %s18, 1
    %s26 = sld [smem:[#allocation3 + %s25]]
    %s27 = scalar_lea.vmem %s1, %s26
    %v28 = vld [vmem:[%s27] sm:$0x1]
    %v29 = vmul.f32 %v28, 5.656854
    %31 = vrot.lane.b32.xlu0 %v29, 32
    %v32 = vpop.permute.xlu0 %31
    %vm34 = vcmask 516352
    %35 = vst.msk [vmem:[#allocation4] sm:$0x1] %vm34, %v32
    %s36 = sadd.s32 %s18, 2
    %s37 = sld [smem:[#allocation3 + %s36]]
    %s38 = scalar_lea.vmem %s1, %s37
    %v39 = vld [vmem:[%s38] sm:$0x1]
    %v40 = vmul.f32 %v39, 5.656854
    %42 = vrot.lane.b32.xlu0 %v40, 64
    %v43 = vpop.permute.xlu0 %42
    %vm45 = vcmask 778752
    %46 = vst.msk [vmem:[#allocation4] sm:$0x1] %vm45, %v43
    %s47 = sadd.s32 %s18, 3
    %s48 = sld [smem:[#allocation3 + %s47]]
    %s49 = scalar_lea.vmem %s1, %s48
    %v50 = vld [vmem:[%s49] sm:$0x1]
    %v51 = vmul.f32 %v50, 5.656854
    %53 = vrot.lane.b32.xlu0 %v51, 96
    %v54 = vpop.permute.xlu0 %53
    %vm56 = vcmask 1041152
    %57 = vst.msk [vmem:[#allocation4] sm:$0x1] %vm56, %v54
    %s58 = sadd.s32 %s18, 4
    %s59 = sld [smem:[#allocation3 + %s58]]
    %s60 = scalar_lea.vmem %s1, %s59
    %v61 = vld [vmem:[%s60] sm:$0x1]
    %v62 = vmul.f32 %v61, 5.656854
    %63 = vst.msk [vmem:[#allocation4 + $0x1] sm:$0x1] %vm23, %v62
    %s64 = sadd.s32 %s18, 5
    %s65 = sld [smem:[#allocation3 + %s64]]
    %s66 = scalar_lea.vmem %s1, %s65
    %v67 = vld [vmem:[%s66] sm:$0x1]
    %v68 = vmul.f32 %v67, 5.656854
    %70 = vrot.lane.b32.xlu0 %v68, 32
    %v71 = vpop.permute.xlu0 %70
    %73 = vst.msk [vmem:[#allocation4 + $0x1] sm:$0x1] %vm34, %v71
    %s74 = sadd.s32 %s18, 6
    %s75 = sld [smem:[#allocation3 + %s74]]
    %s76 = scalar_lea.vmem %s1, %s75
    %v77 = vld [vmem:[%s76] sm:$0x1]
    %v78 = vmul.f32 %v77, 5.656854
    %80 = vrot.lane.b32.xlu0 %v78, 64
    %v81 = vpop.permute.xlu0 %80
    %83 = vst.msk [vmem:[#allocation4 + $0x1] sm:$0x1] %vm45, %v81
    %s84 = sadd.s32 %s18, 7
    %s85 = sld [smem:[#allocation3 + %s84]]
    %s86 = scalar_lea.vmem %s1, %s85
    %v87 = vld [vmem:[%s86] sm:$0x1]
    %v88 = vmul.f32 %v87, 5.656854
    %90 = vrot.lane.b32.xlu0 %v88, 96
    %v91 = vpop.permute.xlu0 %90
    %93 = vst.msk [vmem:[#allocation4 + $0x1] sm:$0x1] %vm56, %v91
    %s94 = sadd.s32 %s18, 8
    %s95 = sld [smem:[#allocation3 + %s94]]
    %s96 = scalar_lea.vmem %s1, %s95
    %v97 = vld [vmem:[%s96] sm:$0x1]
    %v98 = vmul.f32 %v97, 5.656854
    %99 = vst.msk [vmem:[#allocation4 + $0x2] sm:$0x1] %vm23, %v98
    %s100 = sadd.s32 %s18, 9
    %s101 = sld [smem:[#allocation3 + %s100]]
    %s102 = scalar_lea.vmem %s1, %s101
    %v103 = vld [vmem:[%s102] sm:$0x1]
    %v104 = vmul.f32 %v103, 5.656854
    %106 = vrot.lane.b32.xlu0 %v104, 32
    %v107 = vpop.permute.xlu0 %106
    %109 = vst.msk [vmem:[#allocation4 + $0x2] sm:$0x1] %vm34, %v107
    %s110 = sadd.s32 %s18, 10
    %s111 = sld [smem:[#allocation3 + %s110]]
    %s112 = scalar_lea.vmem %s1, %s111
    %v113 = vld [vmem:[%s112] sm:$0x1]
    %v114 = vmul.f32 %v113, 5.656854
    %116 = vrot.lane.b32.xlu0 %v114, 64
    %v117 = vpop.permute.xlu0 %116
    %119 = vst.msk [vmem:[#allocation4 + $0x2] sm:$0x1] %vm45, %v117
    %s120 = sadd.s32 %s18, 11
    %s121 = sld [smem:[#allocation3 + %s120]]
    %s122 = scalar_lea.vmem %s1, %s121
    %v123 = vld [vmem:[%s122] sm:$0x1]
    %v124 = vmul.f32 %v123, 5.656854
    %126 = vrot.lane.b32.xlu0 %v124, 96
    %v127 = vpop.permute.xlu0 %126
    %129 = vst.msk [vmem:[#allocation4 + $0x2] sm:$0x1] %vm56, %v127
    %s130 = sadd.s32 %s18, 12
    %s131 = sld [smem:[#allocation3 + %s130]]
    %s132 = scalar_lea.vmem %s1, %s131
    %v133 = vld [vmem:[%s132] sm:$0x1]
    %v134 = vmul.f32 %v133, 5.656854
    %135 = vst.msk [vmem:[#allocation4 + $0x3] sm:$0x1] %vm23, %v134
    %s136 = sadd.s32 %s18, 13
    %s137 = sld [smem:[#allocation3 + %s136]]
    %s138 = scalar_lea.vmem %s1, %s137
    %v139 = vld [vmem:[%s138] sm:$0x1]
    %v140 = vmul.f32 %v139, 5.656854
    %142 = vrot.lane.b32.xlu0 %v140, 32
    %v143 = vpop.permute.xlu0 %142
    %145 = vst.msk [vmem:[#allocation4 + $0x3] sm:$0x1] %vm34, %v143
    %s146 = sadd.s32 %s18, 14
    %s147 = sld [smem:[#allocation3 + %s146]]
    %s148 = scalar_lea.vmem %s1, %s147
    %v149 = vld [vmem:[%s148] sm:$0x1]
    %v150 = vmul.f32 %v149, 5.656854
    %152 = vrot.lane.b32.xlu0 %v150, 64
    %v153 = vpop.permute.xlu0 %152
    %155 = vst.msk [vmem:[#allocation4 + $0x3] sm:$0x1] %vm45, %v153
    %s156 = sadd.s32 %s18, 15
    %s157 = sld [smem:[#allocation3 + %s156]]
    %s158 = scalar_lea.vmem %s1, %s157
    %v159 = vld [vmem:[%s158] sm:$0x1]
    %v160 = vmul.f32 %v159, 5.656854
    %162 = vrot.lane.b32.xlu0 %v160, 96
    %v163 = vpop.permute.xlu0 %162
    %165 = vst.msk [vmem:[#allocation4 + $0x3] sm:$0x1] %vm56, %v163
    %s166 = sadd.s32 %s18, 16
    %s167 = sld [smem:[#allocation3 + %s166]]
    %s168 = scalar_lea.vmem %s1, %s167
    %v169 = vld [vmem:[%s168] sm:$0x1]
    %v170 = vmul.f32 %v169, 5.656854
    %171 = vst.msk [vmem:[#allocation4 + $0x4] sm:$0x1] %vm23, %v170
    %s172 = sadd.s32 %s18, 17
    %s173 = sld [smem:[#allocation3 + %s172]]
    %s174 = scalar_lea.vmem %s1, %s173
    %v175 = vld [vmem:[%s174] sm:$0x1]
    %v176 = vmul.f32 %v175, 5.656854
    %178 = vrot.lane.b32.xlu0 %v176, 32
    %v179 = vpop.permute.xlu0 %178
    %181 = vst.msk [vmem:[#allocation4 + $0x4] sm:$0x1] %vm34, %v179
    %s182 = sadd.s32 %s18, 18
    %s183 = sld [smem:[#allocation3 + %s182]]
    %s184 = scalar_lea.vmem %s1, %s183
    %v185 = vld [vmem:[%s184] sm:$0x1]
    %v186 = vmul.f32 %v185, 5.656854
    %188 = vrot.lane.b32.xlu0 %v186, 64
    %v189 = vpop.permute.xlu0 %188
    %191 = vst.msk [vmem:[#allocation4 + $0x4] sm:$0x1] %vm45, %v189
    %s192 = sadd.s32 %s18, 19
    %s193 = sld [smem:[#allocation3 + %s192]]
    %s194 = scalar_lea.vmem %s1, %s193
    %v195 = vld [vmem:[%s194] sm:$0x1]
    %v196 = vmul.f32 %v195, 5.656854
    %198 = vrot.lane.b32.xlu0 %v196, 96
    %v199 = vpop.permute.xlu0 %198
    %201 = vst.msk [vmem:[#allocation4 + $0x4] sm:$0x1] %vm56, %v199
    %s202 = sadd.s32 %s18, 20
    %s203 = sld [smem:[#allocation3 + %s202]]
    %s204 = scalar_lea.vmem %s1, %s203
    %v205 = vld [vmem:[%s204] sm:$0x1]
    %v206 = vmul.f32 %v205, 5.656854
    %207 = vst.msk [vmem:[#allocation4 + $0x5] sm:$0x1] %vm23, %v206
    %s208 = sadd.s32 %s18, 21
    %s209 = sld [smem:[#allocation3 + %s208]]
    %s210 = scalar_lea.vmem %s1, %s209
    %v211 = vld [vmem:[%s210] sm:$0x1]
    %v212 = vmul.f32 %v211, 5.656854
    %214 = vrot.lane.b32.xlu0 %v212, 32
    %v215 = vpop.permute.xlu0 %214
    %217 = vst.msk [vmem:[#allocation4 + $0x5] sm:$0x1] %vm34, %v215
    %s218 = sadd.s32 %s18, 22
    %s219 = sld [smem:[#allocation3 + %s218]]
    %s220 = scalar_lea.vmem %s1, %s219
    %v221 = vld [vmem:[%s220] sm:$0x1]
    %v222 = vmul.f32 %v221, 5.656854
    %224 = vrot.lane.b32.xlu0 %v222, 64
    %v225 = vpop.permute.xlu0 %224
    %227 = vst.msk [vmem:[#allocation4 + $0x5] sm:$0x1] %vm45, %v225
    %s228 = sadd.s32 %s18, 23
    %s229 = sld [smem:[#allocation3 + %s228]]
    %s230 = scalar_lea.vmem %s1, %s229
    %v231 = vld [vmem:[%s230] sm:$0x1]
    %v232 = vmul.f32 %v231, 5.656854
    %234 = vrot.lane.b32.xlu0 %v232, 96
    %v235 = vpop.permute.xlu0 %234
    %237 = vst.msk [vmem:[#allocation4 + $0x5] sm:$0x1] %vm56, %v235
    %s238 = sadd.s32 %s18, 24
    %s239 = sld [smem:[#allocation3 + %s238]]
    %s240 = scalar_lea.vmem %s1, %s239
    %v241 = vld [vmem:[%s240] sm:$0x1]
    %v242 = vmul.f32 %v241, 5.656854
    %243 = vst.msk [vmem:[#allocation4 + $0x6] sm:$0x1] %vm23, %v242
    %s244 = sadd.s32 %s18, 25
    %s245 = sld [smem:[#allocation3 + %s244]]
    %s246 = scalar_lea.vmem %s1, %s245
    %v247 = vld [vmem:[%s246] sm:$0x1]
    %v248 = vmul.f32 %v247, 5.656854
    %250 = vrot.lane.b32.xlu0 %v248, 32
    %v251 = vpop.permute.xlu0 %250
    %253 = vst.msk [vmem:[#allocation4 + $0x6] sm:$0x1] %vm34, %v251
    %s254 = sadd.s32 %s18, 26
    %s255 = sld [smem:[#allocation3 + %s254]]
    %s256 = scalar_lea.vmem %s1, %s255
    %v257 = vld [vmem:[%s256] sm:$0x1]
    %v258 = vmul.f32 %v257, 5.656854
    %260 = vrot.lane.b32.xlu0 %v258, 64
    %v261 = vpop.permute.xlu0 %260
    %263 = vst.msk [vmem:[#allocation4 + $0x6] sm:$0x1] %vm45, %v261
    %s264 = sadd.s32 %s18, 27
    %s265 = sld [smem:[#allocation3 + %s264]]
    %s266 = scalar_lea.vmem %s1, %s265
    %v267 = vld [vmem:[%s266] sm:$0x1]
    %v268 = vmul.f32 %v267, 5.656854
    %270 = vrot.lane.b32.xlu0 %v268, 96
    %v271 = vpop.permute.xlu0 %270
    %273 = vst.msk [vmem:[#allocation4 + $0x6] sm:$0x1] %vm56, %v271
    %s274 = sadd.s32 %s18, 28
    %s275 = sld [smem:[#allocation3 + %s274]]
    %s276 = scalar_lea.vmem %s1, %s275
    %v277 = vld [vmem:[%s276] sm:$0x1]
    %v278 = vmul.f32 %v277, 5.656854
    %279 = vst.msk [vmem:[#allocation4 + $0x7] sm:$0x1] %vm23, %v278
    %s280 = sadd.s32 %s18, 29
    %s281 = sld [smem:[#allocation3 + %s280]]
    %s282 = scalar_lea.vmem %s1, %s281
    %v283 = vld [vmem:[%s282] sm:$0x1]
    %v284 = vmul.f32 %v283, 5.656854
    %286 = vrot.lane.b32.xlu0 %v284, 32
    %v287 = vpop.permute.xlu0 %286
    %289 = vst.msk [vmem:[#allocation4 + $0x7] sm:$0x1] %vm34, %v287
    %s290 = sadd.s32 %s18, 30
    %s291 = sld [smem:[#allocation3 + %s290]]
    %s292 = scalar_lea.vmem %s1, %s291
    %v293 = vld [vmem:[%s292] sm:$0x1]
    %v294 = vmul.f32 %v293, 5.656854
    %296 = vrot.lane.b32.xlu0 %v294, 64
    %v297 = vpop.permute.xlu0 %296
    %299 = vst.msk [vmem:[#allocation4 + $0x7] sm:$0x1] %vm45, %v297
    %s300 = sadd.s32 %s18, 31
    %s301 = sld [smem:[#allocation3 + %s300]]
    %s302 = scalar_lea.vmem %s1, %s301
    %v303 = vld [vmem:[%s302] sm:$0x1]
    %v304 = vmul.f32 %v303, 5.656854
    %306 = vrot.lane.b32.xlu0 %v304, 96
    %v307 = vpop.permute.xlu0 %306
    %309 = vst.msk [vmem:[#allocation4 + $0x7] sm:$0x1] %vm56, %v307
    // Predicated region
    $region6: #{tpu_custom_call.1} parent=1 // pred_check
      _
    $region7: #{tpu_custom_call.1} parent=1 // pred_check_branch
      %311 = sbr.rel (0) target = $region9
    $region8: #{tpu_custom_call.1} parent=1 // pred_region
      %313 = vsyncadd [#allocation5], 0
      %s315 = sshll.u32 [#allocation4], 4
      %s316 = int_to_ptr.vmem [resolvable:$true] %s315
      %s317 = sshll.u32 %s2, 4
      %s318 = int_to_ptr.hbm [resolvable:$true] %s317
      %320 = dma.vmem_to_hbm [thread:$0]  %s316, 128, %s318, [#allocation5]
    $region9: #{tpu_custom_call.1} parent=1 // pred_fallthru
      _
    // Predicated region
    $region10: #{tpu_custom_call.1} parent=1 // pred_check
      _
    $region11: #{tpu_custom_call.1} parent=1 // pred_check_branch
      %322 = sbr.rel (0) target = $region13
    $region12: #{tpu_custom_call.1} parent=1 // pred_region
      %324 = dma.done [#allocation5], 128
    $region13: #{tpu_custom_call.1} parent=1 // pred_fallthru
      _
    %325 = vsyncpa [#allocation5], 1

</llo_original>
